<compile_context>
chip_gen: v7x
topology: tpu7x:2x2x1
jax: 0.10.0
libtpu: 0.0.40
codegen_flags: <defaults>
</compile_context>

<pallas_src>
import jax
import jax.numpy as jnp
from jax.experimental import pallas as pl
from jax.experimental.pallas import tpu as pltpu


def attention_kernel(z_ref, w1_ref, b1_ref, w2_ref, out_ref, beta_ref):
    TB, S, D = z_ref.shape
    H = w1_ref.shape[1]

    z = z_ref[...]                                      # (TB, S, D)

    # --- projection: one big MXU matmul over all TB*S tokens ---------------
    zf = z.reshape(TB * S, D)                           # merge leading dims
    h = jnp.tanh(
        jnp.dot(zf, w1_ref[...], preferred_element_type=jnp.float32)
        + b1_ref[...]
    )                                                   # (TB*S, H), f32

    # Second linear (hidden -> 1) as multiply + lane reduce over H, producing
    # lane-dense logits (TB, S).  b2 dropped: softmax(w + c) == softmax(w).
    h3 = h.reshape(TB, S, H)
    logits = jnp.sum(h3 * w2_ref[...], axis=-1)         # (TB, S)

    # --- numerically stable softmax over the sequence (lane) axis ----------
    m = jnp.max(logits, axis=-1, keepdims=True)         # (TB, 1)
    e = jnp.exp(logits - m)                             # (TB, S)
    denom = jnp.sum(e, axis=-1, keepdims=True)          # (TB, 1)
    beta = e * pl.reciprocal(denom, approx=True)        # EUP reciprocal

    # --- weighted sum over S as an MXU contraction --------------------------
    # (TB, 1, S) x (TB, S, D) -> (TB, 1, D): same batched-matmul form as the
    # flash-attention 'bqk,bkd->bqd' pattern.
    out = jnp.einsum(
        "bqs,bsd->bqd",
        beta.reshape(TB, 1, S),
        z,
        preferred_element_type=jnp.float32,
    )                                                   # (TB, 1, D)

    out_ref[...] = out.reshape(TB, D).astype(out_ref.dtype)
    beta_ref[...] = beta.astype(beta_ref.dtype)


def _pick_batch_tile(B, S, D, itemsize, target_bytes=2 << 20):
    """Pick TB so the z block is ~2 MiB: big enough to amortize per-step
    overhead and approach HBM roofline, small enough to double-buffer inside
    the default scoped-VMEM budget on v5e/v6e/v7x."""
    if B <= 8:
        return B
    per_batch = max(S * D * itemsize, 1)
    tb = max(8, min(B, target_bytes // per_batch))
    return int((tb // 8) * 8)   # keep output blocks sublane-aligned (8, ...)


def attention_forward(z, w1, b1, w2, b2=None, tb=None):
    """Forward of the PyTorch Attention module.

    z: (B, S, D); w1: (D, H); b1: (1, H) or (H,); w2: (H, 1)/(1, H)/(H,).
    b2 is accepted for API parity but never DMA'd or added: it cancels
    exactly inside the softmax.  Returns ((B, D), (B, S, 1)).
    """
    del b2  # softmax(w + c) == softmax(w): do not DMA it, do not add it.

    B, S, D = z.shape
    H = w1.shape[1]
    b1 = jnp.asarray(b1).reshape(1, H)
    w2 = jnp.asarray(w2).reshape(1, H)   # lane-dense row vector

    if tb is None:
        tb = _pick_batch_tile(B, S, D, z.dtype.itemsize)
    tb = int(min(tb, B))

    # Pad the batch so it divides evenly into TB-sized blocks (padded rows are
    # zeros -> finite softmax, sliced off below).
    n_blocks = pl.cdiv(B, tb)
    Bp = n_blocks * tb
    zp = z if Bp == B else jnp.pad(z, ((0, Bp - B), (0, 0), (0, 0)))

    # For very long sequences (S*D block too large for VMEM, esp. 64 MiB v7x),
    # add a second "arbitrary" grid axis over S with an online-softmax
    # accumulator; not needed at these shapes.

    out_shapes = (
        jax.ShapeDtypeStruct((Bp, D), z.dtype),        # (beta * z).sum(1)
        jax.ShapeDtypeStruct((Bp, S), jnp.float32),    # beta, lane-dense (B, S)
    )

    out, beta = pl.pallas_call(
        attention_kernel,
        out_shape=out_shapes,
        grid_spec=pltpu.PrefetchScalarGridSpec(
            num_scalar_prefetch=0,
            grid=(n_blocks,),
            in_specs=[
                pl.BlockSpec((tb, S, D), lambda b: (b, 0, 0)),  # z block
                pl.BlockSpec((D, H), lambda b: (0, 0)),         # w1 (resident)
                pl.BlockSpec((1, H), lambda b: (0, 0)),         # b1
                pl.BlockSpec((1, H), lambda b: (0, 0)),         # w2 row
            ],
            out_specs=[
                pl.BlockSpec((tb, D), lambda b: (b, 0)),
                pl.BlockSpec((tb, S), lambda b: (b, 0)),
            ],
        ),
        compiler_params=pltpu.CompilerParams(
            # Independent batch blocks: shards across v7x's 2 TensorCores,
            # no-op on single-TC v5e/v6e.
            dimension_semantics=("parallel",),
            # Raise v5e's 16 MiB scoped default; <= default on v6e/v7x (safe).
            vmem_limit_bytes=32 * 1024 * 1024,
        ),
    )(zp, w1, b1, w2)

    out = out[:B]
    beta = beta[:B].reshape(B, S, 1).astype(z.dtype)   # PyTorch-shaped beta
    return out, beta


def attention_reference(z, w1, b1, w2, b2):
    # Pure-JAX reference of the PyTorch forward, for correctness checking.
    h = jnp.tanh(z @ w1 + b1)            # (B, S, H)
    w = h @ w2 + b2                      # (B, S, 1)
    beta = jax.nn.softmax(w, axis=1)     # softmax over seq
    return (beta * z).sum(axis=1), beta


if __name__ == "__main__":
    # Small shapes consistent with the module: z is (batch, seq, in_size)
    B, S, D, H = 2, 8, 32, 16

    key = jax.random.PRNGKey(0)
    kz, k1, k2, k3, k4 = jax.random.split(key, 5)

    z = jax.random.normal(kz, (B, S, D), dtype=jnp.float32)

    # nn.Linear(in_size, hidden) / nn.Linear(hidden, 1) params, stored
    # transposed for right-multiplication.
    w1 = jax.random.normal(k1, (D, H), dtype=jnp.float32) * (1.0 / jnp.sqrt(D))
    b1 = jax.random.normal(k2, (1, H), dtype=jnp.float32) * 0.01
    w2 = jax.random.normal(k3, (H, 1), dtype=jnp.float32) * (1.0 / jnp.sqrt(H))
    b2 = jax.random.normal(k4, (1, 1), dtype=jnp.float32) * 0.01

    out, beta = attention_forward(z, w1, b1, w2, b2)
    out, beta = jax.block_until_ready(out), jax.block_until_ready(beta)

    out_ref, beta_ref = attention_reference(z, w1, b1, w2, b2)
    assert out.shape == (B, D) and beta.shape == (B, S, 1)
    # Tolerance loosened slightly because of the EUP approx reciprocal in the
    # softmax normalization (still far tighter than bf16).
    assert jnp.allclose(out, out_ref, atol=2e-3, rtol=2e-3), "output mismatch"
    assert jnp.allclose(beta, beta_ref, atol=2e-3, rtol=2e-3), "beta mismatch"

    print("KERNEL_OK")
</pallas_src>

<mosaic_0001>
module attributes {stable_mosaic.version = 11 : i64} {
  func.func @attention_kernel(%arg0: i32, %arg1: memref<2x8x32xf32, #tpu.memory_space<vmem>>, %arg2: memref<32x16xf32, #tpu.memory_space<vmem>>, %arg3: memref<1x16xf32, #tpu.memory_space<vmem>>, %arg4: memref<1x16xf32, #tpu.memory_space<vmem>>, %arg5: memref<2x32xf32, #tpu.memory_space<vmem>>, %arg6: memref<2x8xf32, #tpu.memory_space<vmem>>) attributes {dimension_semantics = [#tpu.dimension_semantics<parallel>], iteration_bounds = array<i64: 1>, scalar_prefetch = 0 : i64, scratch_operands = 0 : i64, tpu.core_type = #tpu.core_type<tc>, window_params = [{transform_indices = @transform_0, window_bounds = array<i64: 2, 8, 32>}, {pipeline_mode = #tpu.pipeline_mode<synchronous>, transform_indices = @transform_1, window_bounds = array<i64: 32, 16>}, {pipeline_mode = #tpu.pipeline_mode<synchronous>, transform_indices = @transform_2, window_bounds = array<i64: 1, 16>}, {pipeline_mode = #tpu.pipeline_mode<synchronous>, transform_indices = @transform_3, window_bounds = array<i64: 1, 16>}, {transform_indices = @transform_4, window_bounds = array<i64: 2, 32>}, {transform_indices = @transform_5, window_bounds = array<i64: 2, 8>}]} {
    %c0 = arith.constant 0 : index
    %c0_0 = arith.constant 0 : index
    %c0_1 = arith.constant 0 : index
    %0 = vector.load %arg1[%c0, %c0_0, %c0_1] : memref<2x8x32xf32, #tpu.memory_space<vmem>>, vector<2x8x32xf32>
    %1 = vector.shape_cast %0 : vector<2x8x32xf32> to vector<16x32xf32>
    %c0_2 = arith.constant 0 : index
    %c0_3 = arith.constant 0 : index
    %2 = vector.load %arg2[%c0_2, %c0_3] : memref<32x16xf32, #tpu.memory_space<vmem>>, vector<32x16xf32>
    %cst = arith.constant dense<0.000000e+00> : vector<16x16xf32>
    %3 = tpu.matmul %1, %2, %cst {dimension_numbers = #tpu.dot_dimension_numbers<[1], [0], [0], [1], [0, 0, 1, 1], [], []>} : vector<16x32xf32>, vector<32x16xf32>, vector<16x16xf32> -> vector<16x16xf32>
    %c0_4 = arith.constant 0 : index
    %c0_5 = arith.constant 0 : index
    %4 = vector.load %arg3[%c0_4, %c0_5] : memref<1x16xf32, #tpu.memory_space<vmem>>, vector<1x16xf32>
    %5 = vector.broadcast %4 : vector<1x16xf32> to vector<16x16xf32>
    %6 = arith.addf %3, %5 : vector<16x16xf32>
    %7 = math.tanh %6 : vector<16x16xf32>
    %8 = vector.shape_cast %7 : vector<16x16xf32> to vector<2x8x16xf32>
    %c0_6 = arith.constant 0 : index
    %c0_7 = arith.constant 0 : index
    %9 = vector.load %arg4[%c0_6, %c0_7] : memref<1x16xf32, #tpu.memory_space<vmem>>, vector<1x16xf32>
    %10 = vector.shape_cast %9 : vector<1x16xf32> to vector<1x1x16xf32>
    %11 = vector.broadcast %10 : vector<1x1x16xf32> to vector<2x8x16xf32>
    %12 = arith.mulf %8, %11 : vector<2x8x16xf32>
    %cst_8 = arith.constant dense<0.000000e+00> : vector<2x8xf32>
    %13 = vector.multi_reduction <add>, %12, %cst_8 [2] : vector<2x8x16xf32> to vector<2x8xf32>
    %cst_9 = arith.constant dense<0xFF800000> : vector<2xf32>
    %14 = vector.multi_reduction <maximumf>, %13, %cst_9 [1] : vector<2x8xf32> to vector<2xf32>
    %15 = vector.shape_cast %14 : vector<2xf32> to vector<2x1xf32>
    %16 = vector.broadcast %15 : vector<2x1xf32> to vector<2x8xf32>
    %17 = arith.subf %13, %16 : vector<2x8xf32>
    %18 = math.exp %17 : vector<2x8xf32>
    %cst_10 = arith.constant dense<0.000000e+00> : vector<2xf32>
    %19 = vector.multi_reduction <add>, %18, %cst_10 [1] : vector<2x8xf32> to vector<2xf32>
    %20 = vector.shape_cast %19 : vector<2xf32> to vector<2x1xf32>
    %21 = tpu.reciprocal %20 {approx = true} : vector<2x1xf32> -> vector<2x1xf32>
    %22 = vector.broadcast %21 : vector<2x1xf32> to vector<2x8xf32>
    %23 = arith.mulf %18, %22 : vector<2x8xf32>
    %24 = vector.shape_cast %23 : vector<2x8xf32> to vector<2x1x8xf32>
    "tpu.trace_start"() <{level = 10 : i32, message = "bqs,bsd->bqd"}> : () -> ()
    %cst_11 = arith.constant dense<0.000000e+00> : vector<2x1x32xf32>
    %25 = tpu.matmul %24, %0, %cst_11 {dimension_numbers = #tpu.dot_dimension_numbers<[2], [1], [1], [2], [0, 0, 0, 1, 1, 2], [0], [0]>} : vector<2x1x8xf32>, vector<2x8x32xf32>, vector<2x1x32xf32> -> vector<2x1x32xf32>
    "tpu.trace_stop"() : () -> ()
    %26 = vector.shape_cast %25 : vector<2x1x32xf32> to vector<2x32xf32>
    %c0_12 = arith.constant 0 : index
    %c0_13 = arith.constant 0 : index
    %27 = vector.load %arg5[%c0_12, %c0_13] : memref<2x32xf32, #tpu.memory_space<vmem>>, vector<2x32xf32>
    tpu.vector_store %arg5[%c0_12, %c0_13], %26 {strides = array<i32>} : memref<2x32xf32, #tpu.memory_space<vmem>>, vector<2x32xf32>,
    %c0_14 = arith.constant 0 : index
    %c0_15 = arith.constant 0 : index
    %28 = vector.load %arg6[%c0_14, %c0_15] : memref<2x8xf32, #tpu.memory_space<vmem>>, vector<2x8xf32>
    tpu.vector_store %arg6[%c0_14, %c0_15], %23 {strides = array<i32>} : memref<2x8xf32, #tpu.memory_space<vmem>>, vector<2x8xf32>,
    return
  }
  func.func @transform_0(%arg0: i32) -> (i32, i32, i32) {
    %c0_i32 = arith.constant 0 : i32
    %c0_i32_0 = arith.constant 0 : i32
    %c0_i32_1 = arith.constant 0 : i32
    return %arg0, %c0_i32, %c0_i32_0 : i32, i32, i32
  }
  func.func @transform_1(%arg0: i32) -> (i32, i32) {
    %c0_i32 = arith.constant 0 : i32
    %c0_i32_0 = arith.constant 0 : i32
    %c0_i32_1 = arith.constant 0 : i32
    return %c0_i32, %c0_i32_0 : i32, i32
  }
  func.func @transform_2(%arg0: i32) -> (i32, i32) {
    %c0_i32 = arith.constant 0 : i32
    %c0_i32_0 = arith.constant 0 : i32
    %c0_i32_1 = arith.constant 0 : i32
    return %c0_i32, %c0_i32_0 : i32, i32
  }
  func.func @transform_3(%arg0: i32) -> (i32, i32) {
    %c0_i32 = arith.constant 0 : i32
    %c0_i32_0 = arith.constant 0 : i32
    %c0_i32_1 = arith.constant 0 : i32
    return %c0_i32, %c0_i32_0 : i32, i32
  }
  func.func @transform_4(%arg0: i32) -> (i32, i32) {
    %c0_i32 = arith.constant 0 : i32
    %c0_i32_0 = arith.constant 0 : i32
    return %arg0, %c0_i32 : i32, i32
  }
  func.func @transform_5(%arg0: i32) -> (i32, i32) {
    %c0_i32 = arith.constant 0 : i32
    %c0_i32_0 = arith.constant 0 : i32
    return %arg0, %c0_i32 : i32, i32
  }
}

</mosaic_0001>

<llo_original>
// kernel: tpu_custom_call.1
$region0: #{tpu_custom_call.1}
  #allocation0 [shape = 'u32[]', space=smem, size = 0x4, offset = 0x4, fixed_abs, tag = 'smem constant byte address 0x4 - core index']
  #allocation1 [shape = 'u32[144,128]{1,0:T(1,128)}', space=vmem, size = 0x12000, scoped, tag = 'internal scratch']
  %s0 = inlined_call_operand.vmem [shape: f32[2,8,32], index: 0, kind: input, shape index: {}]
  %s1 = inlined_call_operand.vmem [shape: f32[32,16], index: 1, kind: input, shape index: {}]
  %s2 = inlined_call_operand.vmem [shape: f32[1,16], index: 2, kind: input, shape index: {}]
  %s3 = inlined_call_operand.vmem [shape: f32[1,16], index: 3, kind: input, shape index: {}]
  %s4 = inlined_call_operand.hbm [shape: f32[2,32], index: 4, kind: output, shape index: {0}]
  %s5 = inlined_call_operand.hbm [shape: f32[2,8], index: 5, kind: output, shape index: {1}]
  %6 = xla_tuple %s4, %s5
  %s7 = sld [smem:[#allocation0]]
  $region34: #{tpu_custom_call.1} parent=0
    _
  %s9 = ssub.s32 1, %s7
  %s10 = scalar_select 0, %s9, %s7
  $region1: #{tpu_custom_call.1} parent=0
    #allocation2 [shape = 'u8[1024]{0}', space=vmem, size = 0x400, scoped, tag = 'output window, operand 0, single buffered']
    #allocation3 [shape = 's32[1]{0}', space=sflag, size = 0x4, scoped, tag = 'scoped memory for tpu_custom_call.1']
    #allocation4 [shape = 'u8[1024]{0}', space=vmem, size = 0x400, scoped, tag = 'output window, operand 1, single buffered']
    #allocation5 [shape = 's32[1]{0}', space=sflag, size = 0x4, scoped, tag = 'scoped memory for tpu_custom_call.1']
    %11 = vsyncpa [#allocation3], 0
    %12 = vsyncpa [#allocation5], 0
    // Predicated region
    $region2: #{tpu_custom_call.1} parent=1 // pred_check
      _
    $region3: #{tpu_custom_call.1} parent=1 // pred_check_branch
      %14 = sbr.rel (0) target = $region5
    $region4: #{tpu_custom_call.1} parent=1 // pred_region
      _
    $region5: #{tpu_custom_call.1} parent=1 // pred_fallthru
      _
    // Predicated region
    $region6: #{tpu_custom_call.1} parent=1 // pred_check
      _
    $region7: #{tpu_custom_call.1} parent=1 // pred_check_branch
      %16 = sbr.rel (0) target = $region9
    $region8: #{tpu_custom_call.1} parent=1 // pred_region
      _
    $region9: #{tpu_custom_call.1} parent=1 // pred_fallthru
      _
    // Predicated region
    $region10: #{tpu_custom_call.1} parent=1 // pred_check
      _
    $region11: #{tpu_custom_call.1} parent=1 // pred_check_branch
      %18 = sbr.rel (0) target = $region13
    $region12: #{tpu_custom_call.1} parent=1 // pred_region
      _
    $region13: #{tpu_custom_call.1} parent=1 // pred_fallthru
      _
    // Predicated region
    $region14: #{tpu_custom_call.1} parent=1 // pred_check
      _
    $region15: #{tpu_custom_call.1} parent=1 // pred_check_branch
      %20 = sbr.rel (0) target = $region17
    $region16: #{tpu_custom_call.1} parent=1 // pred_region
      _
    $region17: #{tpu_custom_call.1} parent=1 // pred_fallthru
      _
    %v21 = vld [vmem:[%s0] sm:$0xff]
    %v22 = vld [vmem:[%s0 + $0x8] sm:$0xff]
    %v23 = vld [vmem:[%s1] sm:$0xff]
    %v24 = vld [vmem:[%s1 + $0x8] sm:$0xff]
    %v25 = vld [vmem:[%s1 + $0x10] sm:$0xff]
    %v26 = vld [vmem:[%s1 + $0x18] sm:$0xff]
    %v27 = vld [vmem:[%s2] sm:$0x1]
    %v29 = vlaneseq
    %v30 = vshrl.u32 %v29, 7
    %v31 = vsub.s32 0, %v30
    %v32 = vrot.slane %v27, %v31
    %vm34 = vcmask 261120
    %v36 = vsel %vm34, %v21, 0
    %v39 = vsel %vm34, %v22, 0
    %41 = vmatprep.subr.mxu0 0.0
    %42 = vmatpush1.msra.mxu0 %v23
    %43 = vmatprep.subr.mxu0 0.0
    %44 = vmatpush1.msra.mxu0 %v24
    %45 = vmatprep.subr.mxu0 0.0
    %46 = vmatpush1.msra.mxu0 %v25
    %47 = vmatprep.subr.mxu0 0.0
    %48 = vmatpush1.msra.mxu0 %v26
    %49 = vmatprep.subr.mxu0 0.0
    %50 = vmatpush1.msra.mxu0 0.0
    %51 = vmatprep.subr.mxu0 0.0
    %52 = vmatpush1.msra.mxu0 0.0
    %53 = vmatprep.subr.mxu0 0.0
    %54 = vmatpush1.msra.mxu0 0.0
    %55 = vmatprep.subr.mxu0 0.0
    %56 = vmatpush1.msra.mxu0 0.0
    %57 = vmatprep.subr.mxu0 0.0
    %58 = vmatpush1.msra.mxu0 0.0
    %59 = vmatprep.subr.mxu0 0.0
    %60 = vmatpush1.msra.mxu0 0.0
    %61 = vmatprep.subr.mxu0 0.0
    %62 = vmatpush1.msra.mxu0 0.0
    %63 = vmatprep.subr.mxu0 0.0
    %64 = vmatpush1.msra.mxu0 0.0
    %65 = vmatprep.subr.mxu0 0.0
    %66 = vmatpush1.msra.mxu0 0.0
    %67 = vmatprep.subr.mxu0 0.0
    %68 = vmatpush1.msra.mxu0 0.0
    %69 = vmatprep.subr.mxu0 0.0
    %70 = vmatpush1.msra.mxu0 0.0
    %71 = vmatprep.subr.mxu0 0.0
    %72 = vmatpush1.msra.mxu0 0.0
    %73 = vmatprep.subr.mxu0 0.0
    %74 = vmatpush1.msra.mxu0 0.0
    %75 = vmatprep.subr.mxu0 0.0
    %76 = vmatpush1.msra.mxu0 0.0
    %77 = vmatprep.subr.mxu0 0.0
    %78 = vmatpush1.msra.mxu0 0.0
    %79 = vmatprep.subr.mxu0 0.0
    %80 = vmatpush1.msra.mxu0 0.0
    %81 = vmatprep.subr.mxu0 0.0
    %82 = vmatpush1.msra.mxu0 0.0
    %83 = vmatprep.subr.mxu0 0.0
    %84 = vmatpush1.msra.mxu0 0.0
    %85 = vmatprep.subr.mxu0 0.0
    %86 = vmatpush1.msra.mxu0 0.0
    %87 = vmatprep.subr.mxu0 0.0
    %88 = vmatpush1.msra.mxu0 0.0
    %89 = vmatprep.subr.mxu0 0.0
    %90 = vmatpush1.msra.mxu0 0.0
    %91 = vmatprep.subr.mxu0 0.0
    %92 = vmatpush1.msra.mxu0 0.0
    %93 = vmatprep.subr.mxu0 0.0
    %94 = vmatpush1.msra.mxu0 0.0
    %95 = vmatprep.subr.mxu0 0.0
    %96 = vmatpush1.msra.mxu0 0.0
    %97 = vmatprep.subr.mxu0 0.0
    %98 = vmatpush1.msra.mxu0 0.0
    %99 = vmatprep.subr.mxu0 0.0
    %100 = vmatpush1.msra.mxu0 0.0
    %101 = vmatprep.subr.mxu0 0.0
    %102 = vmatpush1.msra.mxu0 0.0
    %103 = vmatprep.subr.mxu0 0.0
    %104 = vmatpush1.msra.mxu0 0.0
    %105 = vmatprep.mubr.f32.mxu0 0.0
    %106 = vmatmul.mubr.f32.gmra.mrb[0].mxu0 %v36
    %v107 = vpop.f32.mrb[0].mxu0
    %v108 = vadd.f32 %v32, %v107
    %v109 = vpop.f32.mrb[0].mxu0
    %110 = vmatprep.mubr.f32.mxu0 0.0
    %111 = vmatmul.mubr.f32.gmra.mrb[0].mxu0 %v39
    %v112 = vpop.f32.mrb[0].mxu0
    %v113 = vadd.f32 %v32, %v112
    %v114 = vpop.f32.mrb[0].mxu0
    %115 = vdwg.mxu0
    %v116 = vtanh.pop %v108
    %v117 = vtanh.pop %v113
    %v118 = vld [vmem:[%s3] sm:$0x1]
    %v120 = vlaneseq
    %v121 = vshrl.u32 %v120, 7
    %v122 = vsub.s32 0, %v121
    %v123 = vrot.slane %v118, %v122
    %v125 = vmul.f32 %v116, %v123
    %v126 = vmul.f32 %v117, %v123
    %vm127 = vcmask 130048
    %v128 = vsel %vm127, %v125, 0.0
    %129 = vadd.xlane.f32.xlu0 %v128
    %v130 = vpop.xlane.xlu0 %129
    %v131 = vsel %vm127, %v126, 0.0
    %132 = vadd.xlane.f32.xlu0 %v131
    %v133 = vpop.xlane.xlu0 %132
    %v136 = vlaneseq
    %v137 = vand.u32 %v136, 127
    %v138 = vlaneseq
    %v139 = vshrl.u32 %v138, 7
    %v140 = vsub.s32 %v137, %v139
    %v141 = vrot.slane %v130, %v140
    %v142 = vlaneseq
    %v143 = vshrl.u32 %v142, 7
    %v144 = vsub.s32 %v137, %v143
    %v145 = vrot.slane %v133, %v144
    %vm146 = vcmask 1041409
    %v147 = vsel %vm146, %v145, %v141
    %vm149 = vcmask 58368
    %v150 = vsel %vm149, %v147, -inf
    %151 = vmax.xlane.f32.xlu0 %v150
    %v152 = vpop.xlane.xlu0 %151
    %v154 = vlaneseq
    %v155 = vshrl.u32 %v154, 7
    %v156 = vsub.s32 0, %v155
    %v157 = vrot.slane %v152, %v156
    %v158 = vlaneseq
    %v159 = vshrl.u32 %v158, 7
    %v160 = vsub.s32 1, %v159
    %v161 = vrot.slane %v152, %v160
    %v164 = vsub.f32 %v130, %v157
    %v165 = vsub.f32 %v133, %v161
    %v166 = vmul.f32 %v164, 1.442695
    %v167 = vpow.pop %v166
    %v168 = vmul.f32 %v165, 1.442695
    %v169 = vpow.pop %v168
    %172 = vset.pattern.permute.xlu0 0
    %173 = vperm.xlu0 %172, %v167
    %v174 = vpop.permute.xlu0 %173
    %175 = vset.pattern.permute.xlu0 0
    %176 = vperm.xlu0 %175, %v169
    %v177 = vpop.permute.xlu0 %176
    %v178 = vlaneseq
    %v179 = vshrl.u32 %v178, 7
    %v180 = vsub.s32 %v137, %v179
    %v181 = vrot.slane %v174, %v180
    %v182 = vlaneseq
    %v183 = vshrl.u32 %v182, 7
    %v184 = vsub.s32 %v137, %v183
    %v185 = vrot.slane %v177, %v184
    %v186 = vsel %vm146, %v185, %v181
    %v188 = vsel %vm149, %v186, 0.0
    %189 = vadd.xlane.f32.xlu0 %v188
    %v190 = vpop.xlane.xlu0 %189
    %v191 = vrcp.pop %v190
    %v193 = vlaneseq
    %v194 = vshrl.u32 %v193, 7
    %v195 = vsub.s32 0, %v194
    %v196 = vrot.slane %v191, %v195
    %v197 = vlaneseq
    %v198 = vshrl.u32 %v197, 7
    %v199 = vsub.s32 1, %v198
    %v200 = vrot.slane %v191, %v199
    %v203 = vmul.f32 %v167, %v196
    %v204 = vmul.f32 %v169, %v200
    %206 = vset.pattern.permute.xlu0 0
    %207 = vperm.xlu0 %206, %v203
    %v208 = vpop.permute.xlu0 %207
    %v209 = vlaneseq
    %v210 = vshrl.u32 %v209, 7
    %v211 = vsub.s32 %v137, %v210
    %v212 = vrot.slane %v208, %v211
    %vm213 = vcmask 64512
    %v214 = vsel %vm213, %v212, 0
    %216 = vmatprep.subr.mxu0 0.0
    %217 = vmatpush1.msra.mxu0 %v21
    %218 = vmatprep.subr.mxu0 0.0
    %219 = vmatpush1.msra.mxu0 0.0
    %220 = vmatprep.subr.mxu0 0.0
    %221 = vmatpush1.msra.mxu0 0.0
    %222 = vmatprep.subr.mxu0 0.0
    %223 = vmatpush1.msra.mxu0 0.0
    %224 = vmatprep.subr.mxu0 0.0
    %225 = vmatpush1.msra.mxu0 0.0
    %226 = vmatprep.subr.mxu0 0.0
    %227 = vmatpush1.msra.mxu0 0.0
    %228 = vmatprep.subr.mxu0 0.0
    %229 = vmatpush1.msra.mxu0 0.0
    %230 = vmatprep.subr.mxu0 0.0
    %231 = vmatpush1.msra.mxu0 0.0
    %232 = vmatprep.subr.mxu0 0.0
    %233 = vmatpush1.msra.mxu0 0.0
    %234 = vmatprep.subr.mxu0 0.0
    %235 = vmatpush1.msra.mxu0 0.0
    %236 = vmatprep.subr.mxu0 0.0
    %237 = vmatpush1.msra.mxu0 0.0
    %238 = vmatprep.subr.mxu0 0.0
    %239 = vmatpush1.msra.mxu0 0.0
    %240 = vmatprep.subr.mxu0 0.0
    %241 = vmatpush1.msra.mxu0 0.0
    %242 = vmatprep.subr.mxu0 0.0
    %243 = vmatpush1.msra.mxu0 0.0
    %244 = vmatprep.subr.mxu0 0.0
    %245 = vmatpush1.msra.mxu0 0.0
    %246 = vmatprep.subr.mxu0 0.0
    %247 = vmatpush1.msra.mxu0 0.0
    %248 = vmatprep.subr.mxu0 0.0
    %249 = vmatpush1.msra.mxu0 0.0
    %250 = vmatprep.subr.mxu0 0.0
    %251 = vmatpush1.msra.mxu0 0.0
    %252 = vmatprep.subr.mxu0 0.0
    %253 = vmatpush1.msra.mxu0 0.0
    %254 = vmatprep.subr.mxu0 0.0
    %255 = vmatpush1.msra.mxu0 0.0
    %256 = vmatprep.subr.mxu0 0.0
    %257 = vmatpush1.msra.mxu0 0.0
    %258 = vmatprep.subr.mxu0 0.0
    %259 = vmatpush1.msra.mxu0 0.0
    %260 = vmatprep.subr.mxu0 0.0
    %261 = vmatpush1.msra.mxu0 0.0
    %262 = vmatprep.subr.mxu0 0.0
    %263 = vmatpush1.msra.mxu0 0.0
    %264 = vmatprep.subr.mxu0 0.0
    %265 = vmatpush1.msra.mxu0 0.0
    %266 = vmatprep.subr.mxu0 0.0
    %267 = vmatpush1.msra.mxu0 0.0
    %268 = vmatprep.subr.mxu0 0.0
    %269 = vmatpush1.msra.mxu0 0.0
    %270 = vmatprep.subr.mxu0 0.0
    %271 = vmatpush1.msra.mxu0 0.0
    %272 = vmatprep.subr.mxu0 0.0
    %273 = vmatpush1.msra.mxu0 0.0
    %274 = vmatprep.subr.mxu0 0.0
    %275 = vmatpush1.msra.mxu0 0.0
    %276 = vmatprep.subr.mxu0 0.0
    %277 = vmatpush1.msra.mxu0 0.0
    %278 = vmatprep.subr.mxu0 0.0
    %279 = vmatpush1.msra.mxu0 0.0
    %280 = vmatprep.mubr.f32.mxu0 0.0
    %281 = vmatmul.mubr.f32.gmra.mrb[0].mxu0 %v214
    %v282 = vpop.f32.mrb[0].mxu0
    %v283 = vadd.f32 0.0, %v282
    %v284 = vpop.f32.mrb[0].mxu0
    %285 = vdwg.mxu0
    %287 = vset.pattern.permute.xlu0 0
    %288 = vperm.xlu0 %287, %v204
    %v289 = vpop.permute.xlu0 %288
    %v290 = vlaneseq
    %v291 = vshrl.u32 %v290, 7
    %v292 = vsub.s32 %v137, %v291
    %v293 = vrot.slane %v289, %v292
    %v294 = vsel %vm213, %v293, 0
    %296 = vmatprep.subr.mxu0 0.0
    %297 = vmatpush1.msra.mxu0 %v22
    %298 = vmatprep.subr.mxu0 0.0
    %299 = vmatpush1.msra.mxu0 0.0
    %300 = vmatprep.subr.mxu0 0.0
    %301 = vmatpush1.msra.mxu0 0.0
    %302 = vmatprep.subr.mxu0 0.0
    %303 = vmatpush1.msra.mxu0 0.0
    %304 = vmatprep.subr.mxu0 0.0
    %305 = vmatpush1.msra.mxu0 0.0
    %306 = vmatprep.subr.mxu0 0.0
    %307 = vmatpush1.msra.mxu0 0.0
    %308 = vmatprep.subr.mxu0 0.0
    %309 = vmatpush1.msra.mxu0 0.0
    %310 = vmatprep.subr.mxu0 0.0
    %311 = vmatpush1.msra.mxu0 0.0
    %312 = vmatprep.subr.mxu0 0.0
    %313 = vmatpush1.msra.mxu0 0.0
    %314 = vmatprep.subr.mxu0 0.0
    %315 = vmatpush1.msra.mxu0 0.0
    %316 = vmatprep.subr.mxu0 0.0
    %317 = vmatpush1.msra.mxu0 0.0
    %318 = vmatprep.subr.mxu0 0.0
    %319 = vmatpush1.msra.mxu0 0.0
    %320 = vmatprep.subr.mxu0 0.0
    %321 = vmatpush1.msra.mxu0 0.0
    %322 = vmatprep.subr.mxu0 0.0
    %323 = vmatpush1.msra.mxu0 0.0
    %324 = vmatprep.subr.mxu0 0.0
    %325 = vmatpush1.msra.mxu0 0.0
    %326 = vmatprep.subr.mxu0 0.0
    %327 = vmatpush1.msra.mxu0 0.0
    %328 = vmatprep.subr.mxu0 0.0
    %329 = vmatpush1.msra.mxu0 0.0
    %330 = vmatprep.subr.mxu0 0.0
    %331 = vmatpush1.msra.mxu0 0.0
    %332 = vmatprep.subr.mxu0 0.0
    %333 = vmatpush1.msra.mxu0 0.0
    %334 = vmatprep.subr.mxu0 0.0
    %335 = vmatpush1.msra.mxu0 0.0
    %336 = vmatprep.subr.mxu0 0.0
    %337 = vmatpush1.msra.mxu0 0.0
    %338 = vmatprep.subr.mxu0 0.0
    %339 = vmatpush1.msra.mxu0 0.0
    %340 = vmatprep.subr.mxu0 0.0
    %341 = vmatpush1.msra.mxu0 0.0
    %342 = vmatprep.subr.mxu0 0.0
    %343 = vmatpush1.msra.mxu0 0.0
    %344 = vmatprep.subr.mxu0 0.0
    %345 = vmatpush1.msra.mxu0 0.0
    %346 = vmatprep.subr.mxu0 0.0
    %347 = vmatpush1.msra.mxu0 0.0
    %348 = vmatprep.subr.mxu0 0.0
    %349 = vmatpush1.msra.mxu0 0.0
    %350 = vmatprep.subr.mxu0 0.0
    %351 = vmatpush1.msra.mxu0 0.0
    %352 = vmatprep.subr.mxu0 0.0
    %353 = vmatpush1.msra.mxu0 0.0
    %354 = vmatprep.subr.mxu0 0.0
    %355 = vmatpush1.msra.mxu0 0.0
    %356 = vmatprep.subr.mxu0 0.0
    %357 = vmatpush1.msra.mxu0 0.0
    %358 = vmatprep.subr.mxu0 0.0
    %359 = vmatpush1.msra.mxu0 0.0
    %360 = vmatprep.mubr.f32.mxu0 0.0
    %361 = vmatmul.mubr.f32.gmra.mrb[0].mxu0 %v294
    %v362 = vpop.f32.mrb[0].mxu0
    %v363 = vadd.f32 0.0, %v362
    %v364 = vpop.f32.mrb[0].mxu0
    %365 = vdwg.mxu0
    %v368 = vrot.slane %v363, 7
    %v369 = vsel %vm146, %v368, %v283
    %vm371 = vcmask 254976
    %372 = vst.msk [vmem:[#allocation2] sm:$0x3] %vm371, %v369
    %v373 = vsel %vm146, %v293, %v212
    %375 = vst.msk [vmem:[#allocation4] sm:$0x3] %vm149, %v373
    // Predicated region
    $region18: #{tpu_custom_call.1} parent=1 // pred_check
      _
    $region19: #{tpu_custom_call.1} parent=1 // pred_check_branch
      %377 = sbr.rel (0) target = $region21
    $region20: #{tpu_custom_call.1} parent=1 // pred_region
      %s379 = ssub.s32 32, 32
      %380 = vsyncadd [#allocation3], %s379
      %s382 = sshll.u32 [#allocation2], 4
      %s383 = int_to_ptr.vmem [resolvable:$true] %s382
      %385 = dma.vmem_to_hbm [thread:$0]  %s383, 32, %s4, [#allocation3]
    $region21: #{tpu_custom_call.1} parent=1 // pred_fallthru
      _
    // Predicated region
    $region22: #{tpu_custom_call.1} parent=1 // pred_check
      _
    $region23: #{tpu_custom_call.1} parent=1 // pred_check_branch
      %387 = sbr.rel (0) target = $region25
    $region24: #{tpu_custom_call.1} parent=1 // pred_region
      %s389 = ssub.s32 32, 32
      %390 = vsyncadd [#allocation5], %s389
      %s392 = sshll.u32 [#allocation4], 4
      %s393 = int_to_ptr.vmem [resolvable:$true] %s392
      %395 = dma.vmem_to_hbm [thread:$0]  %s393, 32, %s5, [#allocation5]
    $region25: #{tpu_custom_call.1} parent=1 // pred_fallthru
      _
    // Predicated region
    $region26: #{tpu_custom_call.1} parent=1 // pred_check
      _
    $region27: #{tpu_custom_call.1} parent=1 // pred_check_branch
      %397 = sbr.rel (0) target = $region29
    $region28: #{tpu_custom_call.1} parent=1 // pred_region
      %398 = dma.done [#allocation3], 32
    $region29: #{tpu_custom_call.1} parent=1 // pred_fallthru
      _
    // Predicated region
    $region30: #{tpu_custom_call.1} parent=1 // pred_check
      _
    $region31: #{tpu_custom_call.1} parent=1 // pred_check_branch
      %400 = sbr.rel (0) target = $region33
    $region32: #{tpu_custom_call.1} parent=1 // pred_region
      %401 = dma.done [#allocation5], 32
    $region33: #{tpu_custom_call.1} parent=1 // pred_fallthru
      _
    %402 = vsyncpa [#allocation3], 1
    %403 = vsyncpa [#allocation5], 1

</llo_original>
